<compile_context>
chip_gen: v7x
topology: tpu7x:2x2x1
jax: 0.10.0
libtpu: 0.0.40
codegen_flags: <defaults>
</compile_context>

<pallas_src>
import functools

import jax
import jax.numpy as jnp
from jax import lax
from jax.experimental import pallas as pl
from jax.experimental.pallas import tpu as pltpu

EPS = 1e-5


# ----------------------------------------------------------------------- pass 1
def _depthwise_stats_kernel(ph_ref, wd_ref, dw_ref, st_ref, *, stride, Ho, Wo, TH):
    """Depthwise 3x3 conv for one batch element + per-channel sum / sum-of-squares.

    The image is processed in static row chunks of TH output rows so the f32
    accumulator (TH, Wo, C) stays vreg-resident; each of the 9 taps is read as a
    unit-stride shifted slice of the phase-split input (no 9x im2col blob).
    """
    s = stride
    C = dw_ref.shape[-1]
    ssum = jnp.zeros((1, C), jnp.float32)
    ssq = jnp.zeros((1, C), jnp.float32)

    for r0 in range(0, Ho, TH):                      # static chunking
        th = min(TH, Ho - r0)
        acc = jnp.zeros((th, Wo, C), jnp.float32)
        for kh in range(3):
            for kw in range(3):
                pidx = (kh % s) * s + (kw % s)       # which stride-phase
                qh, qw = kh // s, kw // s            # shift inside the phase
                tap = ph_ref[pidx, pl.ds(r0 + qh, th), pl.ds(qw, Wo), :]
                acc = acc + tap.astype(jnp.float32) * wd_ref[pl.ds(kh * 3 + kw, 1), :]
        dw_ref[pl.ds(r0, th), :, :] = acc.astype(dw_ref.dtype)
        # single-pass BN statistics, accumulated in f32 before any downcast
        ssum = ssum + jnp.sum(jnp.sum(acc, axis=0), axis=0, keepdims=True)
        ssq = ssq + jnp.sum(jnp.sum(acc * acc, axis=0), axis=0, keepdims=True)

    # per-grid-step partial stats (one store; reduced later in JAX)
    st_ref[...] = jnp.concatenate([ssum, ssq], axis=0)


# ----------------------------------------------------------------------- pass 2
def _pointwise_stats_kernel(dw_ref, scd_ref, shd_ref, wp_ref, pw_ref, st_ref, *,
                            use_bf16, hw_valid, th, need_mask):
    """Depthwise-BN affine + ReLU, 1x1 conv on the MXU, pointwise-BN partial stats."""
    h = jnp.maximum(dw_ref[...].astype(jnp.float32) * scd_ref[...] + shd_ref[...], 0.0)
    w = wp_ref[...]
    if use_bf16:
        # ~2x MXU rate and half the weight/activation bytes on v6e/v7x.
        # TODO(synk): int8 weights are an option on v5e/v6e only (v7x MXU is fp8).
        h = h.astype(jnp.bfloat16)
        w = w.astype(jnp.bfloat16)
    else:
        w = w.astype(jnp.float32)
    y = jnp.dot(h, w, preferred_element_type=jnp.float32)        # (th, Cout)
    pw_ref[...] = y.astype(pw_ref.dtype)

    if need_mask:
        # exclude padded spatial rows from the BN statistics
        row = lax.broadcasted_iota(jnp.int32, (th, 1), 0) + pl.program_id(1) * th
        y = jnp.where(row < hw_valid, y, 0.0)
    st_ref[...] = jnp.concatenate(
        [jnp.sum(y, axis=0, keepdims=True), jnp.sum(y * y, axis=0, keepdims=True)],
        axis=0)


# ----------------------------------------------------------------------- pass 3
def _bn_relu_t_kernel(pw_ref, scp_ref, shp_ref, o_ref, *, hw_valid):
    """Pointwise-BN affine + ReLU, fused (HW, Cout) -> (Cout, HW) transpose so the
    output is stored directly in NCHW layout (lane-dense along HW)."""
    y = pw_ref[pl.ds(0, hw_valid), :].astype(jnp.float32)
    y = jnp.maximum(y * scp_ref[...] + shp_ref[...], 0.0)
    o_ref[...] = jnp.transpose(y, (1, 0)).astype(o_ref.dtype)


# ----------------------------------------------------------------------- helpers
def _hw_tile(hw, c_total, target=1024, block_budget=4 << 20):
    """Row tile for the 2-D (rows, channels) passes: multiple of 8, <= target,
    channel-aware so double-buffered in+out blocks stay well under scoped VMEM."""
    t = min(target, -(-hw // 8) * 8)
    t -= t % 8
    t = max(t, 8)
    while t > 8 and 4 * t * c_total * 4 > block_budget:
        t -= 8
    return t


def _bn_affine(stats, gamma, beta, count):
    """Fold biased batch stats + BN affine params into per-channel scale/shift."""
    mean = stats[0] / count
    var = jnp.maximum(stats[1] / count - mean * mean, 0.0)
    scale = gamma * lax.rsqrt(var + EPS)
    shift = beta - mean * scale
    return scale.reshape(1, -1), shift.reshape(1, -1)


# ----------------------------------------------------------------------- wrapper
def depthwise_separable_conv(x_nchw, params, *, stride, bf16=None):
    """Forward pass of DepthwiseSeparableConv.  x_nchw: (N, C, H, W) float32."""
    wd, gamma_d, beta_d, wp, gamma_p, beta_p = params
    N, C, H, W = x_nchw.shape
    Cout = wp.shape[0]
    s = int(stride)
    Ho = (H + 2 - 3) // s + 1
    Wo = (W + 2 - 3) // s + 1
    HW = Ho * Wo
    R = N * HW                                   # total output rows (BN count)

    use_bf16 = (C >= 128) if bf16 is None else bool(bf16)
    inter_dtype = jnp.bfloat16 if use_bf16 else jnp.float32

    # ---- glue: NCHW -> NHWC + zero pad.  Phase split only when stride > 1
    # (for stride 1 it would be an identity copy of xpad).
    # TODO(synk): fold the zero padding into pass 1 with boundary masking to save
    # one more input-sized HBM round trip.
    x = jnp.transpose(x_nchw, (0, 2, 3, 1)).astype(jnp.float32)
    xpad = jnp.pad(x, ((0, 0), (1, 1), (1, 1), (0, 0)))
    Q = 2 // s
    Hp, Wp = Ho + Q, Wo + Q
    if s == 1:
        phases = xpad[:, None]                   # (N, 1, H+2, W+2, C) — free view
    else:
        phs = []
        for rh in range(s):
            for rw in range(s):
                p = xpad[:, rh::s, rw::s, :][:, :Hp, :Wp, :]
                p = jnp.pad(p, ((0, 0), (0, Hp - p.shape[1]),
                                (0, Wp - p.shape[2]), (0, 0)))
                phs.append(p)
        phases = jnp.stack(phs, axis=1)          # (N, s*s, Ho+Q, Wo+Q, C)
    P = s * s

    # ---- glue: parameter reshapes ----
    wd9 = jnp.transpose(wd.reshape(C, 3, 3), (1, 2, 0)).reshape(9, C)    # (9, C)
    wp2 = jnp.transpose(wp.reshape(Cout, C), (1, 0))                     # (C, Cout)

    # ------------- pass 1: depthwise conv + depthwise-BN partial stats -----------
    # channels on the 128-lane axis; accumulator kept vreg-resident via in-kernel
    # row chunking (TH output rows per chunk, <= ~128 KiB f32, <= 16 chunks).
    TH = max(1, min(Ho, (128 * 1024) // max(1, Wo * C * 4)))
    TH = max(TH, -(-Ho // 16))
    dw_kernel = functools.partial(_depthwise_stats_kernel,
                                  stride=s, Ho=Ho, Wo=Wo, TH=TH)
    dwout, dstats = pl.pallas_call(
        dw_kernel,
        grid=(N,),
        in_specs=[
            pl.BlockSpec((None, P, Hp, Wp, C), lambda n: (n, 0, 0, 0, 0)),
            pl.BlockSpec((9, C), lambda n: (0, 0)),
        ],
        out_specs=(
            pl.BlockSpec((None, Ho, Wo, C), lambda n: (n, 0, 0, 0)),
            pl.BlockSpec((None, 2, C), lambda n: (n, 0, 0)),     # per-step partials
        ),
        out_shape=(
            jax.ShapeDtypeStruct((N, Ho, Wo, C), inter_dtype),
            jax.ShapeDtypeStruct((N, 2, C), jnp.float32),
        ),
        compiler_params=pltpu.CompilerParams(dimension_semantics=("parallel",)),
    )(phases, wd9)

    scale_d, shift_d = _bn_affine(jnp.sum(dstats, axis=0), gamma_d, beta_d,
                                  jnp.float32(R))

    # -------- pass 2: BN_d affine + ReLU + 1x1 conv (MXU) + pointwise-BN stats ---
    TH2 = _hw_tile(HW, C + Cout)
    G2 = pl.cdiv(HW, TH2)
    HWpad = G2 * TH2
    need_mask = HWpad != HW
    dw3 = dwout.reshape(N, HW, C)                # contiguous reshape, free in XLA
    if need_mask:
        dw3 = jnp.pad(dw3, ((0, 0), (0, HWpad - HW), (0, 0)))

    pw_kernel = functools.partial(_pointwise_stats_kernel, use_bf16=use_bf16,
                                  hw_valid=HW, th=TH2, need_mask=need_mask)
    pw3, pstats = pl.pallas_call(
        pw_kernel,
        grid=(N, G2),
        in_specs=[
            pl.BlockSpec((None, TH2, C), lambda n, g: (n, g, 0)),
            pl.BlockSpec((1, C), lambda n, g: (0, 0)),
            pl.BlockSpec((1, C), lambda n, g: (0, 0)),
            pl.BlockSpec((C, Cout), lambda n, g: (0, 0)),
        ],
        out_specs=(
            pl.BlockSpec((None, TH2, Cout), lambda n, g: (n, g, 0)),
            pl.BlockSpec((None, 2, Cout), lambda n, g: (n * G2 + g, 0, 0)),
        ),
        out_shape=(
            jax.ShapeDtypeStruct((N, HWpad, Cout), inter_dtype),
            jax.ShapeDtypeStruct((N * G2, 2, Cout), jnp.float32),
        ),
        compiler_params=pltpu.CompilerParams(
            dimension_semantics=("parallel", "parallel")),
    )(dw3, scale_d, shift_d, wp2)

    scale_p, shift_p = _bn_affine(jnp.sum(pstats, axis=0), gamma_p, beta_p,
                                  jnp.float32(R))

    # ------------- pass 3: BN_p affine + ReLU + fused transpose to NCHW ----------
    t_kernel = functools.partial(_bn_relu_t_kernel, hw_valid=HW)
    yt = pl.pallas_call(
        t_kernel,
        grid=(N,),
        in_specs=[
            pl.BlockSpec((None, HWpad, Cout), lambda n: (n, 0, 0)),
            pl.BlockSpec((1, Cout), lambda n: (0, 0)),
            pl.BlockSpec((1, Cout), lambda n: (0, 0)),
        ],
        out_specs=pl.BlockSpec((None, Cout, HW), lambda n: (n, 0, 0)),
        out_shape=jax.ShapeDtypeStruct((N, Cout, HW), jnp.float32),
        compiler_params=pltpu.CompilerParams(dimension_semantics=("parallel",)),
    )(pw3, scale_p, shift_p)

    return yt.reshape(N, Cout, Ho, Wo)           # free reshape — already NCHW


# ----------------------------------------------------------------------- reference
def _reference(x, wd, gamma_d, beta_d, wp, gamma_p, beta_p, stride):
    """Pure-JAX reference (PyTorch training-mode forward semantics)."""
    C = x.shape[1]

    def bn(t, g, b):
        m = jnp.mean(t, axis=(0, 2, 3), keepdims=True)
        v = jnp.mean((t - m) ** 2, axis=(0, 2, 3), keepdims=True)
        return (t - m) * lax.rsqrt(v + EPS) * g.reshape(1, -1, 1, 1) + b.reshape(1, -1, 1, 1)

    y = lax.conv_general_dilated(x, wd, (stride, stride), ((1, 1), (1, 1)),
                                 dimension_numbers=('NCHW', 'OIHW', 'NCHW'),
                                 feature_group_count=C)
    y = jnp.maximum(bn(y, gamma_d, beta_d), 0.0)
    y = lax.conv_general_dilated(y, wp, (1, 1), 'VALID',
                                 dimension_numbers=('NCHW', 'OIHW', 'NCHW'))
    y = jnp.maximum(bn(y, gamma_p, beta_p), 0.0)
    return y


if __name__ == "__main__":
    N, Cin, Cout, H, W = 2, 4, 8, 16, 16

    key = jax.random.PRNGKey(0)
    kx, k1, k2, k3, k4, k5, k6 = jax.random.split(key, 7)

    x = jax.random.normal(kx, (N, Cin, H, W), jnp.float32)
    # parameter shapes follow nn.Conv2d / nn.BatchNorm2d from __init__
    wd = jax.random.normal(k1, (Cin, 1, 3, 3), jnp.float32) * 0.2       # depthwise.weight
    wp = jax.random.normal(k2, (Cout, Cin, 1, 1), jnp.float32) * 0.2    # pointwise.weight
    gamma_d = jax.random.uniform(k3, (Cin,), jnp.float32, 0.5, 1.5)     # bn_depth.weight
    beta_d = jax.random.normal(k4, (Cin,), jnp.float32) * 0.1           # bn_depth.bias
    gamma_p = jax.random.uniform(k5, (Cout,), jnp.float32, 0.5, 1.5)    # bn_point.weight
    beta_p = jax.random.normal(k6, (Cout,), jnp.float32) * 0.1          # bn_point.bias

    params = (wd, gamma_d, beta_d, wp, gamma_p, beta_p)

    for stride in (2, 1):
        out = jax.block_until_ready(depthwise_separable_conv(x, params, stride=stride))
        ref = _reference(x, wd, gamma_d, beta_d, wp, gamma_p, beta_p, stride)
        assert out.shape == ref.shape, (stride, out.shape, ref.shape)
        if not jnp.allclose(out, ref, atol=2e-4, rtol=2e-4):
            raise AssertionError(
                f"stride={stride}: mismatch vs reference, "
                f"max abs err={float(jnp.max(jnp.abs(out - ref)))}")

    print("KERNEL_OK")
</pallas_src>

<mosaic_0001>
module attributes {stable_mosaic.version = 11 : i64} {
  func.func @_depthwise_stats_kernel(%arg0: i32, %arg1: memref<1x4x9x9x4xf32, #tpu.memory_space<vmem>>, %arg2: memref<9x4xf32, #tpu.memory_space<vmem>>, %arg3: memref<1x8x8x4xf32, #tpu.memory_space<vmem>>, %arg4: memref<1x2x4xf32, #tpu.memory_space<vmem>>) attributes {dimension_semantics = [#tpu.dimension_semantics<parallel>], iteration_bounds = array<i64: 2>, scalar_prefetch = 0 : i64, scratch_operands = 0 : i64, tpu.core_type = #tpu.core_type<tc>, window_params = [{transform_indices = @transform_0, window_bounds = array<i64: 1, 4, 9, 9, 4>}, {pipeline_mode = #tpu.pipeline_mode<synchronous>, transform_indices = @transform_1, window_bounds = array<i64: 9, 4>}, {transform_indices = @transform_2, window_bounds = array<i64: 1, 8, 8, 4>}, {transform_indices = @transform_3, window_bounds = array<i64: 1, 2, 4>}]} {
    %cst = arith.constant 0.000000e+00 : f32
    %0 = vector.broadcast %cst : f32 to vector<1x4xf32>
    %cst_0 = arith.constant 0.000000e+00 : f32
    %1 = vector.broadcast %cst_0 : f32 to vector<1x4xf32>
    %cst_1 = arith.constant 0.000000e+00 : f32
    %2 = vector.broadcast %cst_1 : f32 to vector<8x8x4xf32>
    %c0 = arith.constant 0 : index
    %c0_2 = arith.constant 0 : index
    %c0_3 = arith.constant 0 : index
    %c0_4 = arith.constant 0 : index
    %c0_5 = arith.constant 0 : index
    %3 = vector.load %arg1[%c0, %c0_2, %c0_3, %c0_4, %c0_5] : memref<1x4x9x9x4xf32, #tpu.memory_space<vmem>>, vector<1x1x8x8x4xf32>
    %4 = vector.shape_cast %3 : vector<1x1x8x8x4xf32> to vector<8x8x4xf32>
    %c0_6 = arith.constant 0 : index
    %c0_7 = arith.constant 0 : index
    %5 = vector.load %arg2[%c0_6, %c0_7] : memref<9x4xf32, #tpu.memory_space<vmem>>, vector<1x4xf32>
    %6 = vector.shape_cast %5 : vector<1x4xf32> to vector<1x1x4xf32>
    %7 = vector.broadcast %6 : vector<1x1x4xf32> to vector<8x8x4xf32>
    %8 = arith.mulf %4, %7 : vector<8x8x4xf32>
    %9 = arith.addf %2, %8 : vector<8x8x4xf32>
    %c0_8 = arith.constant 0 : index
    %c1 = arith.constant 1 : index
    %c0_9 = arith.constant 0 : index
    %c0_10 = arith.constant 0 : index
    %c0_11 = arith.constant 0 : index
    %10 = vector.load %arg1[%c0_8, %c1, %c0_9, %c0_10, %c0_11] : memref<1x4x9x9x4xf32, #tpu.memory_space<vmem>>, vector<1x1x8x8x4xf32>
    %11 = vector.shape_cast %10 : vector<1x1x8x8x4xf32> to vector<8x8x4xf32>
    %c1_12 = arith.constant 1 : index
    %c0_13 = arith.constant 0 : index
    %12 = vector.load %arg2[%c1_12, %c0_13] : memref<9x4xf32, #tpu.memory_space<vmem>>, vector<1x4xf32>
    %13 = vector.shape_cast %12 : vector<1x4xf32> to vector<1x1x4xf32>
    %14 = vector.broadcast %13 : vector<1x1x4xf32> to vector<8x8x4xf32>
    %15 = arith.mulf %11, %14 : vector<8x8x4xf32>
    %16 = arith.addf %9, %15 : vector<8x8x4xf32>
    %c0_14 = arith.constant 0 : index
    %c0_15 = arith.constant 0 : index
    %c0_16 = arith.constant 0 : index
    %c1_17 = arith.constant 1 : index
    %c0_18 = arith.constant 0 : index
    %17 = vector.load %arg1[%c0_14, %c0_15, %c0_16, %c1_17, %c0_18] : memref<1x4x9x9x4xf32, #tpu.memory_space<vmem>>, vector<1x1x8x8x4xf32>
    %18 = vector.shape_cast %17 : vector<1x1x8x8x4xf32> to vector<8x8x4xf32>
    %c2 = arith.constant 2 : index
    %c0_19 = arith.constant 0 : index
    %19 = vector.load %arg2[%c2, %c0_19] : memref<9x4xf32, #tpu.memory_space<vmem>>, vector<1x4xf32>
    %20 = vector.shape_cast %19 : vector<1x4xf32> to vector<1x1x4xf32>
    %21 = vector.broadcast %20 : vector<1x1x4xf32> to vector<8x8x4xf32>
    %22 = arith.mulf %18, %21 : vector<8x8x4xf32>
    %23 = arith.addf %16, %22 : vector<8x8x4xf32>
    %c0_20 = arith.constant 0 : index
    %c2_21 = arith.constant 2 : index
    %c0_22 = arith.constant 0 : index
    %c0_23 = arith.constant 0 : index
    %c0_24 = arith.constant 0 : index
    %24 = vector.load %arg1[%c0_20, %c2_21, %c0_22, %c0_23, %c0_24] : memref<1x4x9x9x4xf32, #tpu.memory_space<vmem>>, vector<1x1x8x8x4xf32>
    %25 = vector.shape_cast %24 : vector<1x1x8x8x4xf32> to vector<8x8x4xf32>
    %c3 = arith.constant 3 : index
    %c0_25 = arith.constant 0 : index
    %26 = vector.load %arg2[%c3, %c0_25] : memref<9x4xf32, #tpu.memory_space<vmem>>, vector<1x4xf32>
    %27 = vector.shape_cast %26 : vector<1x4xf32> to vector<1x1x4xf32>
    %28 = vector.broadcast %27 : vector<1x1x4xf32> to vector<8x8x4xf32>
    %29 = arith.mulf %25, %28 : vector<8x8x4xf32>
    %30 = arith.addf %23, %29 : vector<8x8x4xf32>
    %c0_26 = arith.constant 0 : index
    %c3_27 = arith.constant 3 : index
    %c0_28 = arith.constant 0 : index
    %c0_29 = arith.constant 0 : index
    %c0_30 = arith.constant 0 : index
    %31 = vector.load %arg1[%c0_26, %c3_27, %c0_28, %c0_29, %c0_30] : memref<1x4x9x9x4xf32, #tpu.memory_space<vmem>>, vector<1x1x8x8x4xf32>
    %32 = vector.shape_cast %31 : vector<1x1x8x8x4xf32> to vector<8x8x4xf32>
    %c4 = arith.constant 4 : index
    %c0_31 = arith.constant 0 : index
    %33 = vector.load %arg2[%c4, %c0_31] : memref<9x4xf32, #tpu.memory_space<vmem>>, vector<1x4xf32>
    %34 = vector.shape_cast %33 : vector<1x4xf32> to vector<1x1x4xf32>
    %35 = vector.broadcast %34 : vector<1x1x4xf32> to vector<8x8x4xf32>
    %36 = arith.mulf %32, %35 : vector<8x8x4xf32>
    %37 = arith.addf %30, %36 : vector<8x8x4xf32>
    %c0_32 = arith.constant 0 : index
    %c2_33 = arith.constant 2 : index
    %c0_34 = arith.constant 0 : index
    %c1_35 = arith.constant 1 : index
    %c0_36 = arith.constant 0 : index
    %38 = vector.load %arg1[%c0_32, %c2_33, %c0_34, %c1_35, %c0_36] : memref<1x4x9x9x4xf32, #tpu.memory_space<vmem>>, vector<1x1x8x8x4xf32>
    %39 = vector.shape_cast %38 : vector<1x1x8x8x4xf32> to vector<8x8x4xf32>
    %c5 = arith.constant 5 : index
    %c0_37 = arith.constant 0 : index
    %40 = vector.load %arg2[%c5, %c0_37] : memref<9x4xf32, #tpu.memory_space<vmem>>, vector<1x4xf32>
    %41 = vector.shape_cast %40 : vector<1x4xf32> to vector<1x1x4xf32>
    %42 = vector.broadcast %41 : vector<1x1x4xf32> to vector<8x8x4xf32>
    %43 = arith.mulf %39, %42 : vector<8x8x4xf32>
    %44 = arith.addf %37, %43 : vector<8x8x4xf32>
    %c0_38 = arith.constant 0 : index
    %c0_39 = arith.constant 0 : index
    %c1_40 = arith.constant 1 : index
    %c0_41 = arith.constant 0 : index
    %c0_42 = arith.constant 0 : index
    %45 = vector.load %arg1[%c0_38, %c0_39, %c1_40, %c0_41, %c0_42] : memref<1x4x9x9x4xf32, #tpu.memory_space<vmem>>, vector<1x1x8x8x4xf32>
    %46 = vector.shape_cast %45 : vector<1x1x8x8x4xf32> to vector<8x8x4xf32>
    %c6 = arith.constant 6 : index
    %c0_43 = arith.constant 0 : index
    %47 = vector.load %arg2[%c6, %c0_43] : memref<9x4xf32, #tpu.memory_space<vmem>>, vector<1x4xf32>
    %48 = vector.shape_cast %47 : vector<1x4xf32> to vector<1x1x4xf32>
    %49 = vector.broadcast %48 : vector<1x1x4xf32> to vector<8x8x4xf32>
    %50 = arith.mulf %46, %49 : vector<8x8x4xf32>
    %51 = arith.addf %44, %50 : vector<8x8x4xf32>
    %c0_44 = arith.constant 0 : index
    %c1_45 = arith.constant 1 : index
    %c1_46 = arith.constant 1 : index
    %c0_47 = arith.constant 0 : index
    %c0_48 = arith.constant 0 : index
    %52 = vector.load %arg1[%c0_44, %c1_45, %c1_46, %c0_47, %c0_48] : memref<1x4x9x9x4xf32, #tpu.memory_space<vmem>>, vector<1x1x8x8x4xf32>
    %53 = vector.shape_cast %52 : vector<1x1x8x8x4xf32> to vector<8x8x4xf32>
    %c7 = arith.constant 7 : index
    %c0_49 = arith.constant 0 : index
    %54 = vector.load %arg2[%c7, %c0_49] : memref<9x4xf32, #tpu.memory_space<vmem>>, vector<1x4xf32>
    %55 = vector.shape_cast %54 : vector<1x4xf32> to vector<1x1x4xf32>
    %56 = vector.broadcast %55 : vector<1x1x4xf32> to vector<8x8x4xf32>
    %57 = arith.mulf %53, %56 : vector<8x8x4xf32>
    %58 = arith.addf %51, %57 : vector<8x8x4xf32>
    %c0_50 = arith.constant 0 : index
    %c0_51 = arith.constant 0 : index
    %c1_52 = arith.constant 1 : index
    %c1_53 = arith.constant 1 : index
    %c0_54 = arith.constant 0 : index
    %59 = vector.load %arg1[%c0_50, %c0_51, %c1_52, %c1_53, %c0_54] : memref<1x4x9x9x4xf32, #tpu.memory_space<vmem>>, vector<1x1x8x8x4xf32>
    %60 = vector.shape_cast %59 : vector<1x1x8x8x4xf32> to vector<8x8x4xf32>
    %c8 = arith.constant 8 : index
    %c0_55 = arith.constant 0 : index
    %61 = vector.load %arg2[%c8, %c0_55] : memref<9x4xf32, #tpu.memory_space<vmem>>, vector<1x4xf32>
    %62 = vector.shape_cast %61 : vector<1x4xf32> to vector<1x1x4xf32>
    %63 = vector.broadcast %62 : vector<1x1x4xf32> to vector<8x8x4xf32>
    %64 = arith.mulf %60, %63 : vector<8x8x4xf32>
    %65 = arith.addf %58, %64 : vector<8x8x4xf32>
    %c0_56 = arith.constant 0 : index
    %c0_57 = arith.constant 0 : index
    %c0_58 = arith.constant 0 : index
    %c0_59 = arith.constant 0 : index
    %66 = vector.load %arg3[%c0_56, %c0_57, %c0_58, %c0_59] : memref<1x8x8x4xf32, #tpu.memory_space<vmem>>, vector<1x8x8x4xf32>
    %67 = vector.shape_cast %66 : vector<1x8x8x4xf32> to vector<8x8x4xf32>
    %68 = vector.shape_cast %65 : vector<8x8x4xf32> to vector<1x8x8x4xf32>
    tpu.vector_store %arg3[%c0_56, %c0_57, %c0_58, %c0_59], %68 {strides = array<i32>} : memref<1x8x8x4xf32, #tpu.memory_space<vmem>>, vector<1x8x8x4xf32>,
    %cst_60 = arith.constant dense<0.000000e+00> : vector<8x4xf32>
    %69 = vector.multi_reduction <add>, %65, %cst_60 [0] : vector<8x8x4xf32> to vector<8x4xf32>
    %cst_61 = arith.constant dense<0.000000e+00> : vector<4xf32>
    %70 = vector.multi_reduction <add>, %69, %cst_61 [0] : vector<8x4xf32> to vector<4xf32>
    %71 = vector.shape_cast %70 : vector<4xf32> to vector<1x4xf32>
    %72 = arith.addf %0, %71 : vector<1x4xf32>
    %73 = arith.mulf %65, %65 : vector<8x8x4xf32>
    %cst_62 = arith.constant dense<0.000000e+00> : vector<8x4xf32>
    %74 = vector.multi_reduction <add>, %73, %cst_62 [0] : vector<8x8x4xf32> to vector<8x4xf32>
    %cst_63 = arith.constant dense<0.000000e+00> : vector<4xf32>
    %75 = vector.multi_reduction <add>, %74, %cst_63 [0] : vector<8x4xf32> to vector<4xf32>
    %76 = vector.shape_cast %75 : vector<4xf32> to vector<1x4xf32>
    %77 = arith.addf %1, %76 : vector<1x4xf32>
    %78 = tpu.concatenate %72, %77 in 0 : vector<1x4xf32>, vector<1x4xf32> -> vector<2x4xf32>
    %c0_64 = arith.constant 0 : index
    %c0_65 = arith.constant 0 : index
    %c0_66 = arith.constant 0 : index
    %79 = vector.load %arg4[%c0_64, %c0_65, %c0_66] : memref<1x2x4xf32, #tpu.memory_space<vmem>>, vector<1x2x4xf32>
    %80 = vector.shape_cast %79 : vector<1x2x4xf32> to vector<2x4xf32>
    %81 = vector.shape_cast %78 : vector<2x4xf32> to vector<1x2x4xf32>
    tpu.vector_store %arg4[%c0_64, %c0_65, %c0_66], %81 {strides = array<i32>} : memref<1x2x4xf32, #tpu.memory_space<vmem>>, vector<1x2x4xf32>,
    return
  }
  func.func @transform_0(%arg0: i32) -> (i32, i32, i32, i32, i32) {
    %c0_i32 = arith.constant 0 : i32
    %c0_i32_0 = arith.constant 0 : i32
    %c0_i32_1 = arith.constant 0 : i32
    %c0_i32_2 = arith.constant 0 : i32
    %c0_i32_3 = arith.constant 0 : i32
    return %arg0, %c0_i32, %c0_i32_0, %c0_i32_1, %c0_i32_2 : i32, i32, i32, i32, i32
  }
  func.func @transform_1(%arg0: i32) -> (i32, i32) {
    %c0_i32 = arith.constant 0 : i32
    %c0_i32_0 = arith.constant 0 : i32
    %c0_i32_1 = arith.constant 0 : i32
    return %c0_i32, %c0_i32_0 : i32, i32
  }
  func.func @transform_2(%arg0: i32) -> (i32, i32, i32, i32) {
    %c0_i32 = arith.constant 0 : i32
    %c0_i32_0 = arith.constant 0 : i32
    %c0_i32_1 = arith.constant 0 : i32
    %c0_i32_2 = arith.constant 0 : i32
    return %arg0, %c0_i32, %c0_i32_0, %c0_i32_1 : i32, i32, i32, i32
  }
  func.func @transform_3(%arg0: i32) -> (i32, i32, i32) {
    %c0_i32 = arith.constant 0 : i32
    %c0_i32_0 = arith.constant 0 : i32
    %c0_i32_1 = arith.constant 0 : i32
    return %arg0, %c0_i32, %c0_i32_0 : i32, i32, i32
  }
}

</mosaic_0001>

<llo_original>
// kernel: tpu_custom_call.1
$region0: #{tpu_custom_call.1}
  #allocation0 [shape = 'u32[]', space=smem, size = 0x4, offset = 0x4, fixed_abs, tag = 'smem constant byte address 0x4 - core index']
  #allocation1 [shape = 'u32[144,128]{1,0:T(1,128)}', space=vmem, size = 0x12000, scoped, tag = 'internal scratch']
  %s0 = inlined_call_operand.vmem [shape: f32[2,4,9,9,4], index: 0, kind: input, shape index: {}]
  %s1 = inlined_call_operand.vmem [shape: f32[9,4], index: 1, kind: input, shape index: {}]
  %s2 = inlined_call_operand.vmem [shape: f32[2,8,8,4], index: 2, kind: output, shape index: {0}]
  %s3 = inlined_call_operand.hbm [shape: f32[2,2,4], index: 3, kind: output, shape index: {1}]
  %4 = xla_tuple %s2, %s3
  %s5 = sld [smem:[#allocation0]]
  $region49: #{tpu_custom_call.1} parent=0
    _
  %s7 = ssub.s32 1, %s5
  %s8 = scalar_select 0, %s7, %s5
  $region1: #{tpu_custom_call.1} parent=0
    #allocation2 [shape = 'u8[2048]{0}', space=vmem, size = 0x800, scoped, tag = 'output window, operand 1']
    #allocation3 [shape = 's32[2]{0}', space=sflag, size = 0x8, scoped, tag = 'scoped memory for tpu_custom_call.1']
    %9 = vsyncpa [#allocation3], 0
    %s10 = scalar_lea.sflag [#allocation3], 1
    %11 = vsyncpa %s10, 0
    loop: start=0, step=1, limit=4
    $region2: #{tpu_custom_call.1} parent=1 // loop_pre_header
      _
    $region3: #{tpu_custom_call.1} parent=1 // loop_header
      %s13 = sphi 0, %s17
      %p14 = scmp.ge.s32.totalorder %s13, 4
      %s23 = sphi 0, %s25
      %s26 = sphi 0, %s23
      %s27 = sphi 0, %s26
      %s43 = sphi 0, %s27
      %s47 = sphi 0, %s47
      %s49 = sphi 0, %s47
      %s50 = sphi 0, %s49
      %s64 = sphi 0, %s50
      %s70 = sphi 0, %s72
      %s73 = sphi 0, %s70
      %s74 = sphi 0, %s73
      %s90 = sphi 0, %s74
      %s96 = sphi 0, %s98
      %s99 = sphi 0, %s96
      %s100 = sphi 0, %s99
      %s116 = sphi 0, %s100
    $region4: #{tpu_custom_call.1} parent=1 // loop_header_branch
      %16 = sbr.rel (%p14) target = $region8
    $region5: #{tpu_custom_call.1} parent=1 // loop_body
      %s18 = ssub.s32 %s13, 1
      %s19 = ssub.s32 %s13, 2
      %s20 = sadd.s32 %s13, 1
      %s21 = ssub.s32 %s13, %s20
      %p22 = scmp.eq.s32.totalorder %s21, 0
      %s24 = sadd.s32 %s23, 1
      %s25 = scalar_select %p22, %s23, %s24
      %p28 = pneg %p22
      %p29 = scmp.eq.s32.totalorder %s13, 1
      %p30 = por %p28, %p29
      %p31 = scmp.ne.s32.totalorder %s23, %s26
      %p32 = scmp.eq.s32.totalorder %s13, 0
      %p33 = por %p31, %p32
      %p34 = scmp.ne.s32.totalorder %s23, %s26
      %p35 = scmp.eq.s32.totalorder %s18, 1
      %p36 = por %p34, %p35
      %p37 = scmp.ne.s32.totalorder %s26, %s27
      %p38 = scmp.eq.s32.totalorder %s18, 0
      %p39 = por %p37, %p38
      %p40 = scmp.ne.s32.totalorder %s26, %s27
      %p41 = scmp.eq.s32.totalorder %s19, 1
      %p42 = por %p40, %p41
      %p44 = scmp.ne.s32.totalorder %s27, %s43
      %p45 = scmp.eq.s32.totalorder %s19, 0
      %p46 = por %p44, %p45
      %s48 = sadd.s32 %s47, 1
      %p51 = scmp.eq.s32.totalorder %s13, 1
      %p52 = scmp.ne.s32.totalorder %s47, %s49
      %p53 = scmp.eq.s32.totalorder %s13, 0
      %p54 = por %p52, %p53
      %p55 = scmp.ne.s32.totalorder %s47, %s49
      %p56 = scmp.eq.s32.totalorder %s18, 1
      %p57 = por %p55, %p56
      %p58 = scmp.ne.s32.totalorder %s49, %s50
      %p59 = scmp.eq.s32.totalorder %s18, 0
      %p60 = por %p58, %p59
      %p61 = scmp.ne.s32.totalorder %s49, %s50
      %p62 = scmp.eq.s32.totalorder %s19, 1
      %p63 = por %p61, %p62
      %p65 = scmp.ne.s32.totalorder %s50, %s64
      %p66 = scmp.eq.s32.totalorder %s19, 0
      %p67 = por %p65, %p66
      %s68 = ssub.s32 %s13, %s20
      %p69 = scmp.eq.s32.totalorder %s68, 0
      %s71 = sadd.s32 %s70, 1
      %s72 = scalar_select %p69, %s70, %s71
      %p75 = pneg %p69
      %p76 = scmp.eq.s32.totalorder %s13, 1
      %p77 = por %p75, %p76
      %p78 = scmp.ne.s32.totalorder %s70, %s73
      %p79 = scmp.eq.s32.totalorder %s13, 0
      %p80 = por %p78, %p79
      %p81 = scmp.ne.s32.totalorder %s70, %s73
      %p82 = scmp.eq.s32.totalorder %s18, 1
      %p83 = por %p81, %p82
      %p84 = scmp.ne.s32.totalorder %s73, %s74
      %p85 = scmp.eq.s32.totalorder %s18, 0
      %p86 = por %p84, %p85
      %p87 = scmp.ne.s32.totalorder %s73, %s74
      %p88 = scmp.eq.s32.totalorder %s19, 1
      %p89 = por %p87, %p88
      %p91 = scmp.ne.s32.totalorder %s74, %s90
      %p92 = scmp.eq.s32.totalorder %s19, 0
      %p93 = por %p91, %p92
      %s94 = ssub.s32 %s13, %s20
      %p95 = scmp.eq.s32.totalorder %s94, 0
      %s97 = sadd.s32 %s96, 1
      %s98 = scalar_select %p95, %s96, %s97
      %p101 = pneg %p95
      %p102 = scmp.eq.s32.totalorder %s13, 1
      %p103 = por %p101, %p102
      %p104 = scmp.ne.s32.totalorder %s96, %s99
      %p105 = scmp.eq.s32.totalorder %s13, 0
      %p106 = por %p104, %p105
      %p107 = scmp.ne.s32.totalorder %s96, %s99
      %p108 = scmp.eq.s32.totalorder %s18, 1
      %p109 = por %p107, %p108
      %p110 = scmp.ne.s32.totalorder %s99, %s100
      %p111 = scmp.eq.s32.totalorder %s18, 0
      %p112 = por %p110, %p111
      %p113 = scmp.ne.s32.totalorder %s99, %s100
      %p114 = scmp.eq.s32.totalorder %s19, 1
      %p115 = por %p113, %p114
      %p117 = scmp.ne.s32.totalorder %s100, %s116
      %p118 = scmp.eq.s32.totalorder %s19, 0
      %p119 = por %p117, %p118
      %p120 = scmp.le.s32.totalorder 1, %s13
      %p121 = scmp.lt.s32.totalorder %s13, 3
      %p122 = pnand %p120, %p121
      %p123 = pneg %p122
      // Predicated region
      $region9: #{tpu_custom_call.1} parent=5 // pred_check
        _
      $region10: #{tpu_custom_call.1} parent=5 // pred_check_branch
        %125 = sbr.rel (%p122) target = $region12
      $region11: #{tpu_custom_call.1} parent=5 // pred_region
        %s126 = ssub.s32 %s13, 1
        // Predicated region
        $region13: #{tpu_custom_call.1} parent=11 // pred_check
          %p127 = pneg %p60
        $region14: #{tpu_custom_call.1} parent=11 // pred_check_branch
          %129 = sbr.rel (%p127) target = $region16
        $region15: #{tpu_custom_call.1} parent=11 // pred_region
          _
        $region16: #{tpu_custom_call.1} parent=11 // pred_fallthru
          _
      $region12: #{tpu_custom_call.1} parent=5 // pred_fallthru
        _
      %p130 = scmp.lt.s32.totalorder %s13, 2
      // Predicated region
      $region17: #{tpu_custom_call.1} parent=5 // pred_check
        %p131 = pneg %p130
      $region18: #{tpu_custom_call.1} parent=5 // pred_check_branch
        %133 = sbr.rel (%p131) target = $region20
      $region19: #{tpu_custom_call.1} parent=5 // pred_region
        // Predicated region
        $region21: #{tpu_custom_call.1} parent=19 // pred_check
          %p134 = pneg %p33
        $region22: #{tpu_custom_call.1} parent=19 // pred_check_branch
          %136 = sbr.rel (%p134) target = $region24
        $region23: #{tpu_custom_call.1} parent=19 // pred_region
          %p137 = scmp.lt.s32.totalorder %s13, 1
          %s138 = scalar_select %p137, %s13, 1
          %s139 = smul.addr %s138, 72
          %s140 = smul.addr %s139, 8
          %s141 = scalar_lea.vmem %s0, %s140
        $region24: #{tpu_custom_call.1} parent=19 // pred_fallthru
          _
      $region20: #{tpu_custom_call.1} parent=5 // pred_fallthru
        _
      %p142 = scmp.le.s32.totalorder 1, %s13
      %p143 = scmp.lt.s32.totalorder %s13, 3
      %p144 = pnand %p142, %p143
      %p145 = pneg %p144
      // Predicated region
      $region25: #{tpu_custom_call.1} parent=5 // pred_check
        _
      $region26: #{tpu_custom_call.1} parent=5 // pred_check_branch
        %147 = sbr.rel (%p144) target = $region28
      $region27: #{tpu_custom_call.1} parent=5 // pred_region
        %s148 = ssub.s32 %s13, 1
        %p149 = scmp.lt.s32.totalorder %s18, 1
        %s150 = scalar_select %p149, %s18, 1
        %s151 = smul.addr %s150, 72
        %s152 = smul.addr %s151, 8
        %s153 = scalar_lea.vmem %s0, %s152
        %p154 = pneg %p39
        %p155 = pneg %p36
        %p156 = pneg %p60
        %p157 = pneg %p57
        %p158 = pneg %p86
        %p159 = pneg %p83
        %p160 = scmp.lt.s32.totalorder %s18, 1
        %s161 = scalar_select %p160, %s18, 1
        %s162 = smul.addr %s161, 8
        %s163 = smul.addr %s162, 8
        %s164 = scalar_lea.vmem %s2, %s163
        %p165 = pneg %p112
        %p166 = pneg %p109
        %s167 = sand.u32 %s99, 1
        %s168 = scalar_lea.sflag [#allocation3], %s167
        %s169 = sand.u32 %s99, 1
        %s170 = smul.addr %s169, 2
        %s171 = scalar_lea.vmem [#allocation2], %s170
        %p172 = scmp.lt.s32.totalorder %s18, 1
        %s173 = scalar_select %p172, %s18, 1
        %s174 = smul.addr %s173, 72
        %s175 = smul.addr %s174, 8
        %s176 = scalar_lea.vmem %s0, %s175
        %p177 = scmp.lt.s32.totalorder %s18, 1
        %s178 = scalar_select %p177, %s18, 1
        %s179 = smul.addr %s178, 8
        %s180 = smul.addr %s179, 8
        %s181 = scalar_lea.vmem %s2, %s180
        %v182 = vld [vmem:[%s176] sm:$0xff]
        %v183 = vld [vmem:[%s176 + $0x10] sm:$0xff]
        %v184 = vld [vmem:[%s176 + $0x20] sm:$0xff]
        %v185 = vld [vmem:[%s176 + $0x30] sm:$0xff]
        %v186 = vld [vmem:[%s176 + $0x40] sm:$0xff]
        %v187 = vld [vmem:[%s176 + $0x50] sm:$0xff]
        %v188 = vld [vmem:[%s176 + $0x60] sm:$0xff]
        %v189 = vld [vmem:[%s176 + $0x70] sm:$0xff]
        %v190 = vld [vmem:[%s1] sm:$0x1]
        %v191 = vlaneseq
        %v192 = vshrl.u32 %v191, 7
        %v193 = vsub.s32 0, %v192
        %v194 = vrot.slane %v190, %v193
        %v195 = vmul.f32 %v182, %v194
        %v196 = vmul.f32 %v183, %v194
        %v197 = vmul.f32 %v184, %v194
        %v198 = vmul.f32 %v185, %v194
        %v199 = vmul.f32 %v186, %v194
        %v200 = vmul.f32 %v187, %v194
        %v201 = vmul.f32 %v188, %v194
        %v202 = vmul.f32 %v189, %v194
        %v203 = vadd.f32 %v195, 0.0
        %v204 = vadd.f32 %v196, 0.0
        %v205 = vadd.f32 %v197, 0.0
        %v206 = vadd.f32 %v198, 0.0
        %v207 = vadd.f32 %v199, 0.0
        %v208 = vadd.f32 %v200, 0.0
        %v209 = vadd.f32 %v201, 0.0
        %v210 = vadd.f32 %v202, 0.0
        %s211 = scalar_lea.vmem %s176, 144
        %v212 = vld [vmem:[%s211] sm:$0xff]
        %v213 = vld [vmem:[%s211 + $0x10] sm:$0xff]
        %v214 = vld [vmem:[%s211 + $0x20] sm:$0xff]
        %v215 = vld [vmem:[%s211 + $0x30] sm:$0xff]
        %v216 = vld [vmem:[%s211 + $0x40] sm:$0xff]
        %v217 = vld [vmem:[%s211 + $0x50] sm:$0xff]
        %v218 = vld [vmem:[%s211 + $0x60] sm:$0xff]
        %v219 = vld [vmem:[%s211 + $0x70] sm:$0xff]
        %v220 = vld [vmem:[%s1 + $0x1] sm:$0x1]
        %v221 = vlaneseq
        %v222 = vshrl.u32 %v221, 7
        %v223 = vsub.s32 0, %v222
        %v224 = vrot.slane %v220, %v223
        %v225 = vmul.f32 %v212, %v224
        %v226 = vmul.f32 %v213, %v224
        %v227 = vmul.f32 %v214, %v224
        %v228 = vmul.f32 %v215, %v224
        %v229 = vmul.f32 %v216, %v224
        %v230 = vmul.f32 %v217, %v224
        %v231 = vmul.f32 %v218, %v224
        %v232 = vmul.f32 %v219, %v224
        %v233 = vadd.f32 %v203, %v225
        %v234 = vadd.f32 %v204, %v226
        %v235 = vadd.f32 %v205, %v227
        %v236 = vadd.f32 %v206, %v228
        %v237 = vadd.f32 %v207, %v229
        %v238 = vadd.f32 %v208, %v230
        %v239 = vadd.f32 %v209, %v231
        %v240 = vadd.f32 %v210, %v232
        %v241 = vld [vmem:[%s176 + $0x1] sm:$0xff]
        %v242 = vld [vmem:[%s176 + $0x11] sm:$0xff]
        %v243 = vld [vmem:[%s176 + $0x21] sm:$0xff]
        %v244 = vld [vmem:[%s176 + $0x31] sm:$0xff]
        %v245 = vld [vmem:[%s176 + $0x41] sm:$0xff]
        %v246 = vld [vmem:[%s176 + $0x51] sm:$0xff]
        %v247 = vld [vmem:[%s176 + $0x61] sm:$0xff]
        %v248 = vld [vmem:[%s176 + $0x71] sm:$0xff]
        %v249 = vld [vmem:[%s1 + $0x2] sm:$0x1]
        %v250 = vlaneseq
        %v251 = vshrl.u32 %v250, 7
        %v252 = vsub.s32 0, %v251
        %v253 = vrot.slane %v249, %v252
        %v254 = vmul.f32 %v241, %v253
        %v255 = vmul.f32 %v242, %v253
        %v256 = vmul.f32 %v243, %v253
        %v257 = vmul.f32 %v244, %v253
        %v258 = vmul.f32 %v245, %v253
        %v259 = vmul.f32 %v246, %v253
        %v260 = vmul.f32 %v247, %v253
        %v261 = vmul.f32 %v248, %v253
        %v262 = vadd.f32 %v233, %v254
        %v263 = vadd.f32 %v234, %v255
        %v264 = vadd.f32 %v235, %v256
        %v265 = vadd.f32 %v236, %v257
        %v266 = vadd.f32 %v237, %v258
        %v267 = vadd.f32 %v238, %v259
        %v268 = vadd.f32 %v239, %v260
        %v269 = vadd.f32 %v240, %v261
        %s270 = scalar_lea.vmem %s176, 288
        %v271 = vld [vmem:[%s270] sm:$0xff]
        %v272 = vld [vmem:[%s270 + $0x10] sm:$0xff]
        %v273 = vld [vmem:[%s270 + $0x20] sm:$0xff]
        %v274 = vld [vmem:[%s270 + $0x30] sm:$0xff]
        %v275 = vld [vmem:[%s270 + $0x40] sm:$0xff]
        %v276 = vld [vmem:[%s270 + $0x50] sm:$0xff]
        %v277 = vld [vmem:[%s270 + $0x60] sm:$0xff]
        %v278 = vld [vmem:[%s270 + $0x70] sm:$0xff]
        %v279 = vld [vmem:[%s1 + $0x3] sm:$0x1]
        %v280 = vlaneseq
        %v281 = vshrl.u32 %v280, 7
        %v282 = vsub.s32 0, %v281
        %v283 = vrot.slane %v279, %v282
        %v284 = vmul.f32 %v271, %v283
        %v285 = vmul.f32 %v272, %v283
        %v286 = vmul.f32 %v273, %v283
        %v287 = vmul.f32 %v274, %v283
        %v288 = vmul.f32 %v275, %v283
        %v289 = vmul.f32 %v276, %v283
        %v290 = vmul.f32 %v277, %v283
        %v291 = vmul.f32 %v278, %v283
        %v292 = vadd.f32 %v262, %v284
        %v293 = vadd.f32 %v263, %v285
        %v294 = vadd.f32 %v264, %v286
        %v295 = vadd.f32 %v265, %v287
        %v296 = vadd.f32 %v266, %v288
        %v297 = vadd.f32 %v267, %v289
        %v298 = vadd.f32 %v268, %v290
        %v299 = vadd.f32 %v269, %v291
        %s300 = scalar_lea.vmem %s176, 432
        %v301 = vld [vmem:[%s300] sm:$0xff]
        %v302 = vld [vmem:[%s300 + $0x10] sm:$0xff]
        %v303 = vld [vmem:[%s300 + $0x20] sm:$0xff]
        %v304 = vld [vmem:[%s300 + $0x30] sm:$0xff]
        %v305 = vld [vmem:[%s300 + $0x40] sm:$0xff]
        %v306 = vld [vmem:[%s300 + $0x50] sm:$0xff]
        %v307 = vld [vmem:[%s300 + $0x60] sm:$0xff]
        %v308 = vld [vmem:[%s300 + $0x70] sm:$0xff]
        %v309 = vld [vmem:[%s1 + $0x4] sm:$0x1]
        %v310 = vlaneseq
        %v311 = vshrl.u32 %v310, 7
        %v312 = vsub.s32 0, %v311
        %v313 = vrot.slane %v309, %v312
        %v314 = vmul.f32 %v301, %v313
        %v315 = vmul.f32 %v302, %v313
        %v316 = vmul.f32 %v303, %v313
        %v317 = vmul.f32 %v304, %v313
        %v318 = vmul.f32 %v305, %v313
        %v319 = vmul.f32 %v306, %v313
        %v320 = vmul.f32 %v307, %v313
        %v321 = vmul.f32 %v308, %v313
        %v322 = vadd.f32 %v292, %v314
        %v323 = vadd.f32 %v293, %v315
        %v324 = vadd.f32 %v294, %v316
        %v325 = vadd.f32 %v295, %v317
        %v326 = vadd.f32 %v296, %v318
        %v327 = vadd.f32 %v297, %v319
        %v328 = vadd.f32 %v298, %v320
        %v329 = vadd.f32 %v299, %v321
        %v330 = vld [vmem:[%s270 + $0x1] sm:$0xff]
        %v331 = vld [vmem:[%s270 + $0x11] sm:$0xff]
        %v332 = vld [vmem:[%s270 + $0x21] sm:$0xff]
        %v333 = vld [vmem:[%s270 + $0x31] sm:$0xff]
        %v334 = vld [vmem:[%s270 + $0x41] sm:$0xff]
        %v335 = vld [vmem:[%s270 + $0x51] sm:$0xff]
        %v336 = vld [vmem:[%s270 + $0x61] sm:$0xff]
        %v337 = vld [vmem:[%s270 + $0x71] sm:$0xff]
        %v338 = vld [vmem:[%s1 + $0x5] sm:$0x1]
        %v339 = vlaneseq
        %v340 = vshrl.u32 %v339, 7
        %v341 = vsub.s32 0, %v340
        %v342 = vrot.slane %v338, %v341
        %v343 = vmul.f32 %v330, %v342
        %v344 = vmul.f32 %v331, %v342
        %v345 = vmul.f32 %v332, %v342
        %v346 = vmul.f32 %v333, %v342
        %v347 = vmul.f32 %v334, %v342
        %v348 = vmul.f32 %v335, %v342
        %v349 = vmul.f32 %v336, %v342
        %v350 = vmul.f32 %v337, %v342
        %v351 = vadd.f32 %v322, %v343
        %v352 = vadd.f32 %v323, %v344
        %v353 = vadd.f32 %v324, %v345
        %v354 = vadd.f32 %v325, %v346
        %v355 = vadd.f32 %v326, %v347
        %v356 = vadd.f32 %v327, %v348
        %v357 = vadd.f32 %v328, %v349
        %v358 = vadd.f32 %v329, %v350
        %s359 = scalar_lea.vmem %s176, 16
        %v360 = vld [vmem:[%s359] sm:$0xff]
        %v361 = vld [vmem:[%s359 + $0x10] sm:$0xff]
        %v362 = vld [vmem:[%s359 + $0x20] sm:$0xff]
        %v363 = vld [vmem:[%s359 + $0x30] sm:$0xff]
        %v364 = vld [vmem:[%s359 + $0x40] sm:$0xff]
        %v365 = vld [vmem:[%s359 + $0x50] sm:$0xff]
        %v366 = vld [vmem:[%s359 + $0x60] sm:$0xff]
        %v367 = vld [vmem:[%s359 + $0x70] sm:$0xff]
        %v368 = vld [vmem:[%s1 + $0x6] sm:$0x1]
        %v369 = vlaneseq
        %v370 = vshrl.u32 %v369, 7
        %v371 = vsub.s32 0, %v370
        %v372 = vrot.slane %v368, %v371
        %v373 = vmul.f32 %v360, %v372
        %v374 = vmul.f32 %v361, %v372
        %v375 = vmul.f32 %v362, %v372
        %v376 = vmul.f32 %v363, %v372
        %v377 = vmul.f32 %v364, %v372
        %v378 = vmul.f32 %v365, %v372
        %v379 = vmul.f32 %v366, %v372
        %v380 = vmul.f32 %v367, %v372
        %v381 = vadd.f32 %v351, %v373
        %v382 = vadd.f32 %v352, %v374
        %v383 = vadd.f32 %v353, %v375
        %v384 = vadd.f32 %v354, %v376
        %v385 = vadd.f32 %v355, %v377
        %v386 = vadd.f32 %v356, %v378
        %v387 = vadd.f32 %v357, %v379
        %v388 = vadd.f32 %v358, %v380
        %s389 = scalar_lea.vmem %s176, 160
        %v390 = vld [vmem:[%s389] sm:$0xff]
        %v391 = vld [vmem:[%s389 + $0x10] sm:$0xff]
        %v392 = vld [vmem:[%s389 + $0x20] sm:$0xff]
        %v393 = vld [vmem:[%s389 + $0x30] sm:$0xff]
        %v394 = vld [vmem:[%s389 + $0x40] sm:$0xff]
        %v395 = vld [vmem:[%s389 + $0x50] sm:$0xff]
        %v396 = vld [vmem:[%s389 + $0x60] sm:$0xff]
        %v397 = vld [vmem:[%s389 + $0x70] sm:$0xff]
        %v398 = vld [vmem:[%s1 + $0x7] sm:$0x1]
        %v399 = vlaneseq
        %v400 = vshrl.u32 %v399, 7
        %v401 = vsub.s32 0, %v400
        %v402 = vrot.slane %v398, %v401
        %v403 = vmul.f32 %v390, %v402
        %v404 = vmul.f32 %v391, %v402
        %v405 = vmul.f32 %v392, %v402
        %v406 = vmul.f32 %v393, %v402
        %v407 = vmul.f32 %v394, %v402
        %v408 = vmul.f32 %v395, %v402
        %v409 = vmul.f32 %v396, %v402
        %v410 = vmul.f32 %v397, %v402
        %v411 = vadd.f32 %v381, %v403
        %v412 = vadd.f32 %v382, %v404
        %v413 = vadd.f32 %v383, %v405
        %v414 = vadd.f32 %v384, %v406
        %v415 = vadd.f32 %v385, %v407
        %v416 = vadd.f32 %v386, %v408
        %v417 = vadd.f32 %v387, %v409
        %v418 = vadd.f32 %v388, %v410
        %v419 = vld [vmem:[%s359 + $0x1] sm:$0xff]
        %v420 = vld [vmem:[%s359 + $0x11] sm:$0xff]
        %v421 = vld [vmem:[%s359 + $0x21] sm:$0xff]
        %v422 = vld [vmem:[%s359 + $0x31] sm:$0xff]
        %v423 = vld [vmem:[%s359 + $0x41] sm:$0xff]
        %v424 = vld [vmem:[%s359 + $0x51] sm:$0xff]
        %v425 = vld [vmem:[%s359 + $0x61] sm:$0xff]
        %v426 = vld [vmem:[%s359 + $0x71] sm:$0xff]
        %v427 = vld [vmem:[%s1 + $0x8] sm:$0x1]
        %v428 = vlaneseq
        %v429 = vshrl.u32 %v428, 7
        %v430 = vsub.s32 0, %v429
        %v431 = vrot.slane %v427, %v430
        %v432 = vmul.f32 %v419, %v431
        %v433 = vmul.f32 %v420, %v431
        %v434 = vmul.f32 %v421, %v431
        %v435 = vmul.f32 %v422, %v431
        %v436 = vmul.f32 %v423, %v431
        %v437 = vmul.f32 %v424, %v431
        %v438 = vmul.f32 %v425, %v431
        %v439 = vmul.f32 %v426, %v431
        %v440 = vadd.f32 %v411, %v432
        %v441 = vadd.f32 %v412, %v433
        %v442 = vadd.f32 %v413, %v434
        %v443 = vadd.f32 %v414, %v435
        %v444 = vadd.f32 %v415, %v436
        %v445 = vadd.f32 %v416, %v437
        %v446 = vadd.f32 %v417, %v438
        %v447 = vadd.f32 %v418, %v439
        %vm448 = vcmask 31744
        %449 = vst.msk [vmem:[%s181] sm:$0xff] %vm448, %v440
        %450 = vst.msk [vmem:[%s181 + $0x8] sm:$0xff] %vm448, %v441
        %451 = vst.msk [vmem:[%s181 + $0x10] sm:$0xff] %vm448, %v442
        %452 = vst.msk [vmem:[%s181 + $0x18] sm:$0xff] %vm448, %v443
        %453 = vst.msk [vmem:[%s181 + $0x20] sm:$0xff] %vm448, %v444
        %454 = vst.msk [vmem:[%s181 + $0x28] sm:$0xff] %vm448, %v445
        %455 = vst.msk [vmem:[%s181 + $0x30] sm:$0xff] %vm448, %v446
        %456 = vst.msk [vmem:[%s181 + $0x38] sm:$0xff] %vm448, %v447
        %v457 = vsel %vm448, %v440, 0.0
        %v458 = vsel %vm448, %v441, 0.0
        %v459 = vadd.f32 %v457, %v458
        %v460 = vsel %vm448, %v442, 0.0
        %v461 = vadd.f32 %v459, %v460
        %v462 = vsel %vm448, %v443, 0.0
        %v463 = vadd.f32 %v461, %v462
        %v464 = vsel %vm448, %v444, 0.0
        %v465 = vadd.f32 %v463, %v464
        %v466 = vsel %vm448, %v445, 0.0
        %v467 = vadd.f32 %v465, %v466
        %v468 = vsel %vm448, %v446, 0.0
        %v469 = vadd.f32 %v467, %v468
        %v470 = vsel %vm448, %v447, 0.0
        %v471 = vadd.f32 %v469, %v470
        %v472 = vsel %vm448, %v471, 0.0
        %v473 = vrot.slane %v472, 4
        %v474 = vadd.f32 %v472, %v473
        %v475 = vrot.slane %v474, 2
        %v476 = vadd.f32 %v474, %v475
        %v477 = vrot.slane %v476, 1
        %v478 = vadd.f32 %v476, %v477
        %v479 = vadd.f32 %v478, 0.0
        %v480 = vmul.f32 %v440, %v440
        %v481 = vmul.f32 %v441, %v441
        %v482 = vmul.f32 %v442, %v442
        %v483 = vmul.f32 %v443, %v443
        %v484 = vmul.f32 %v444, %v444
        %v485 = vmul.f32 %v445, %v445
        %v486 = vmul.f32 %v446, %v446
        %v487 = vmul.f32 %v447, %v447
        %v488 = vsel %vm448, %v480, 0.0
        %v489 = vsel %vm448, %v481, 0.0
        %v490 = vadd.f32 %v488, %v489
        %v491 = vsel %vm448, %v482, 0.0
        %v492 = vadd.f32 %v490, %v491
        %v493 = vsel %vm448, %v483, 0.0
        %v494 = vadd.f32 %v492, %v493
        %v495 = vsel %vm448, %v484, 0.0
        %v496 = vadd.f32 %v494, %v495
        %v497 = vsel %vm448, %v485, 0.0
        %v498 = vadd.f32 %v496, %v497
        %v499 = vsel %vm448, %v486, 0.0
        %v500 = vadd.f32 %v498, %v499
        %v501 = vsel %vm448, %v487, 0.0
        %v502 = vadd.f32 %v500, %v501
        %v503 = vsel %vm448, %v502, 0.0
        %v504 = vrot.slane %v503, 4
        %v505 = vadd.f32 %v503, %v504
        %v506 = vrot.slane %v505, 2
        %v507 = vadd.f32 %v505, %v506
        %v508 = vrot.slane %v507, 1
        %v509 = vadd.f32 %v507, %v508
        %v510 = vadd.f32 %v509, 0.0
        %vm511 = vcmask 1040384
        %v512 = vsel %vm511, %v479, %v510
        %vm513 = vcmask 25600
        %514 = vst.msk [vmem:[%s171] sm:$0x3] %vm513, %v512
        %p515 = scmp.lt.s32.totalorder %s18, 1
        %s516 = scalar_select %p515, %s18, 1
        %s517 = smul.addr %s516, 8
        %s518 = smul.addr %s517, 8
        %s519 = scalar_lea.vmem %s2, %s518
        %s520 = sand.u32 %s99, 1
        %s521 = scalar_lea.sflag [#allocation3], %s520
        %s522 = sand.u32 %s99, 1
        %s523 = smul.addr %s522, 2
        %s524 = scalar_lea.vmem [#allocation2], %s523
        // Predicated region
        $region29: #{tpu_custom_call.1} parent=27 // pred_check
          %p525 = pneg %p83
        $region30: #{tpu_custom_call.1} parent=27 // pred_check_branch
          %527 = sbr.rel (%p525) target = $region32
        $region31: #{tpu_custom_call.1} parent=27 // pred_region
          _
        $region32: #{tpu_custom_call.1} parent=27 // pred_fallthru
          _
        // Predicated region
        $region33: #{tpu_custom_call.1} parent=27 // pred_check
          %p528 = pneg %p109
        $region34: #{tpu_custom_call.1} parent=27 // pred_check_branch
          %530 = sbr.rel (%p528) target = $region36
        $region35: #{tpu_custom_call.1} parent=27 // pred_region
          %s532 = ssub.s32 32, 32
          %533 = vsyncadd %s521, %s532
          %s534 = smul.addr %s18, 32
          %s535 = scalar_lea.hbm %s3, %s534
          %s537 = sshll.u32 %s524, 4
          %s538 = int_to_ptr.vmem [resolvable:$true] %s537
          %540 = dma.vmem_to_hbm [thread:$0]  %s538, 32, %s535, %s521
        $region36: #{tpu_custom_call.1} parent=27 // pred_fallthru
          _
      $region28: #{tpu_custom_call.1} parent=5 // pred_fallthru
        _
      %p541 = scmp.le.s32.totalorder 2, %s13
      // Predicated region
      $region37: #{tpu_custom_call.1} parent=5 // pred_check
        %p542 = pneg %p541
      $region38: #{tpu_custom_call.1} parent=5 // pred_check_branch
        %544 = sbr.rel (%p542) target = $region40
      $region39: #{tpu_custom_call.1} parent=5 // pred_region
        %s545 = ssub.s32 %s13, 2
        // Predicated region
        $region41: #{tpu_custom_call.1} parent=39 // pred_check
          %p546 = pneg %p89
        $region42: #{tpu_custom_call.1} parent=39 // pred_check_branch
          %548 = sbr.rel (%p546) target = $region44
        $region43: #{tpu_custom_call.1} parent=39 // pred_region
          %p549 = scmp.lt.s32.totalorder %s19, 1
          %s550 = scalar_select %p549, %s19, 1
          %s551 = smul.addr %s550, 8
          %s552 = smul.addr %s551, 8
          %s553 = scalar_lea.vmem %s2, %s552
        $region44: #{tpu_custom_call.1} parent=39 // pred_fallthru
          _
        // Predicated region
        $region45: #{tpu_custom_call.1} parent=39 // pred_check
          %p554 = pneg %p115
        $region46: #{tpu_custom_call.1} parent=39 // pred_check_branch
          %556 = sbr.rel (%p554) target = $region48
        $region47: #{tpu_custom_call.1} parent=39 // pred_region
          %s557 = sand.u32 %s100, 1
          %s558 = scalar_lea.sflag [#allocation3], %s557
          %s559 = sand.u32 %s100, 1
          %s560 = smul.addr %s559, 2
          %s561 = scalar_lea.vmem [#allocation2], %s560
          %562 = dma.done %s558, 32
        $region48: #{tpu_custom_call.1} parent=39 // pred_fallthru
          _
      $region40: #{tpu_custom_call.1} parent=5 // pred_fallthru
        _
    $region6: #{tpu_custom_call.1} parent=1 // loop_footer
      %s17 = sadd.s32 1, %s13
    $region7: #{tpu_custom_call.1} parent=1 // loop_footer_branch
      %12 = sbr.rel target = $region3
    $region8: #{tpu_custom_call.1} parent=1 // loop_exit
      _
    %563 = vsyncpa [#allocation3], 1
    %s564 = scalar_lea.sflag [#allocation3], 1
    %565 = vsyncpa %s564, 1

</llo_original>
